<compile_context>
chip_gen: v5e
topology: v5e:2x2
jax: 0.10.0
libtpu: 0.0.40
codegen_flags: <defaults>
</compile_context>

<pallas_src>
import functools

import jax
import jax.numpy as jnp
from jax.experimental import pallas as pl
from jax.experimental.pallas import tpu as pltpu

_LANE = 128
_STEP_BUDGET = 4 * 1024 * 1024  # in+out bytes per grid step (Pallas double-buffers -> ~8 MiB VMEM)


def _injective_pad_kernel(x_ref, o_ref, *, pad):
    # x_ref: (tb, C,       thw)
    # o_ref: (tb, C + pad, thw)
    x = x_ref[...]
    if pad == 0:
        o_ref[...] = x
    else:
        zeros = jnp.zeros((x.shape[0], pad, x.shape[2]), x.dtype)
        # Single lane-dense, full-height store (avoids two sublane-masked
        # partial stores when C / Cout are not multiples of the sublane tile).
        o_ref[...] = jnp.concatenate([x, zeros], axis=1)


def _pick_tiles(B, C, Cout, HW, itemsize):
    """Choose (tb, n_b, thw, n_hw) for the grid / BlockSpecs."""
    # Bytes per lane element per batch element, counting input + output blocks.
    row_bytes = (C + Cout) * itemsize

    # --- spatial (lane) tile ---
    if HW <= _LANE:
        thw = HW  # full-extent last dim is always a legal block
    else:
        # Largest 128-multiple tile that keeps a single-batch step in budget.
        max_thw = max(_LANE, (_STEP_BUDGET // row_bytes) // _LANE * _LANE)
        if HW % _LANE == 0 and HW <= max_thw:
            thw = HW
        else:
            # 128-multiple tile; ragged last block is masked by Pallas.
            thw = min(max_thw, (HW // _LANE) * _LANE)
    n_hw = pl.cdiv(HW, thw)

    # --- batch tile: fatten small steps up to the budget ---
    step_bytes = max(1, row_bytes * thw)
    tb = max(1, min(B, _STEP_BUDGET // step_bytes))
    n_b = pl.cdiv(B, tb)

    # --- ensure >= 2 parallel grid steps so both v7x TensorCores get work ---
    if n_b * n_hw < 2:
        if B >= 2:
            tb = pl.cdiv(B, 2)
            n_b = pl.cdiv(B, tb)
        elif thw > _LANE:
            thw = pl.cdiv(pl.cdiv(thw, 2), _LANE) * _LANE
            n_hw = pl.cdiv(HW, thw)
    return tb, n_b, thw, n_hw


def injective_pad_forward(x, pad_size):
    """Pallas implementation of injective_pad.forward. x: (B, C, H, W) NCHW."""
    B, C, H, W = x.shape
    Cout = C + pad_size
    HW = H * W
    itemsize = jnp.dtype(x.dtype).itemsize

    # Free, contiguous reshape: flatten spatial dims onto the lane axis.
    x2 = x.reshape(B, C, HW)

    tb, n_b, thw, n_hw = _pick_tiles(B, C, Cout, HW, itemsize)

    kernel = functools.partial(_injective_pad_kernel, pad=pad_size)

    cost = pl.CostEstimate(
        flops=0,
        transcendentals=0,
        bytes_accessed=(B * C * HW + B * Cout * HW) * itemsize,
    )

    out2 = pl.pallas_call(
        kernel,
        out_shape=jax.ShapeDtypeStruct((B, Cout, HW), x.dtype),
        grid=(n_b, n_hw),
        in_specs=[pl.BlockSpec((tb, C, thw), lambda b, t: (b, 0, t))],
        out_specs=pl.BlockSpec((tb, Cout, thw), lambda b, t: (b, 0, t)),
        compiler_params=pltpu.CompilerParams(
            dimension_semantics=("parallel", "parallel")),
        cost_estimate=cost,
    )(x2)

    # Free reshape back to the NCHW output layout of the PyTorch module.
    return out2.reshape(B, Cout, H, W)


def _injective_pad_reference(x, pad_size):
    """Pure-JAX reference of the PyTorch module for verification."""
    return jnp.pad(x, ((0, 0), (0, pad_size), (0, 0), (0, 0)))


if __name__ == "__main__":
    pad_size = 3
    B, C, H, W = 2, 4, 16, 16

    key = jax.random.PRNGKey(0)
    x = jax.random.normal(key, (B, C, H, W), dtype=jnp.float32)

    out = injective_pad_forward(x, pad_size)
    out = jax.block_until_ready(out)

    ref = _injective_pad_reference(x, pad_size)
    assert out.shape == (B, C + pad_size, H, W), out.shape
    assert jnp.allclose(out, ref), "mismatch vs reference"

    print("KERNEL_OK")
</pallas_src>

<mosaic_0001>
module attributes {stable_mosaic.version = 11 : i64} {
  func.func @_injective_pad_kernel(%arg0: i32, %arg1: i32, %arg2: memref<1x4x256xf32, #tpu.memory_space<vmem>>, %arg3: memref<1x7x256xf32, #tpu.memory_space<vmem>>) attributes {dimension_semantics = [#tpu.dimension_semantics<parallel>, #tpu.dimension_semantics<parallel>], iteration_bounds = array<i64: 2, 1>, scalar_prefetch = 0 : i64, scratch_operands = 0 : i64, tpu.core_type = #tpu.core_type<tc>, window_params = [{transform_indices = @transform_0, window_bounds = array<i64: 1, 4, 256>}, {transform_indices = @transform_1, window_bounds = array<i64: 1, 7, 256>}]} {
    %c0 = arith.constant 0 : index
    %c0_0 = arith.constant 0 : index
    %c0_1 = arith.constant 0 : index
    %0 = vector.load %arg2[%c0, %c0_0, %c0_1] : memref<1x4x256xf32, #tpu.memory_space<vmem>>, vector<1x4x256xf32>
    %cst = arith.constant 0.000000e+00 : f32
    %1 = vector.broadcast %cst : f32 to vector<1x3x256xf32>
    %2 = tpu.concatenate %0, %1 in 1 : vector<1x4x256xf32>, vector<1x3x256xf32> -> vector<1x7x256xf32>
    %c0_2 = arith.constant 0 : index
    %c0_3 = arith.constant 0 : index
    %c0_4 = arith.constant 0 : index
    %3 = vector.load %arg3[%c0_2, %c0_3, %c0_4] : memref<1x7x256xf32, #tpu.memory_space<vmem>>, vector<1x7x256xf32>
    tpu.vector_store %arg3[%c0_2, %c0_3, %c0_4], %2 {strides = array<i32>} : memref<1x7x256xf32, #tpu.memory_space<vmem>>, vector<1x7x256xf32>,
    return
  }
  func.func @transform_0(%arg0: i32, %arg1: i32) -> (i32, i32, i32) {
    %c0_i32 = arith.constant 0 : i32
    %c0_i32_0 = arith.constant 0 : i32
    return %arg0, %c0_i32, %arg1 : i32, i32, i32
  }
  func.func @transform_1(%arg0: i32, %arg1: i32) -> (i32, i32, i32) {
    %c0_i32 = arith.constant 0 : i32
    %c0_i32_0 = arith.constant 0 : i32
    return %arg0, %c0_i32, %arg1 : i32, i32, i32
  }
}

</mosaic_0001>

<llo_original>
// kernel: tpu_custom_call.1
$region0: #{tpu_custom_call.1}
  #allocation0 [shape = 'u32[]', space=smem, size = 0x4, offset = 0x4, fixed_abs, tag = 'smem constant byte address 0x4 - core index']
  #allocation1 [shape = 'u32[72,128]{1,0:T(1,128)}', space=vmem, size = 0x9000, scoped, tag = 'internal scratch']
  %s0 = inlined_call_operand.hbm [shape: f32[2,4,256], index: 0, kind: input, shape index: {}]
  %s1 = inlined_call_operand.vmem [shape: f32[2,7,256], index: 1, kind: output, shape index: {}]
  %s2 = sld [smem:[#allocation0]]
  $region41: #{tpu_custom_call.1} parent=0
    _
  %s4 = ssub.s32 1, %s2
  %s5 = scalar_select 0, %s4, %s2
  $region1: #{tpu_custom_call.1} parent=0
    #allocation2 [shape = 'u8[8192]{0}', space=vmem, size = 0x2000, scoped, tag = 'input window, operand 0']
    #allocation3 [shape = 's32[2]{0}', space=sflag, size = 0x8, scoped, tag = 'scoped memory for tpu_custom_call.1']
    %6 = vsyncpa [#allocation3], 0
    %s7 = scalar_lea.sflag [#allocation3], 1
    %8 = vsyncpa %s7, 0
    loop: start=0, step=1, limit=4
    $region2: #{tpu_custom_call.1} parent=1 // loop_pre_header
      _
    $region3: #{tpu_custom_call.1} parent=1 // loop_header
      %s10 = sphi 0, %s14
      %p11 = scmp.ge.s32.totalorder %s10, 4
      %s17 = sphi 0, %s29
      %s18 = sphi 0, %s25
      %s19 = sphi 0, %s17
      %s20 = sphi 0, %s18
      %s21 = sphi 0, %s19
      %s22 = sphi 0, %s20
      %s34 = sphi 0, %s36
      %s37 = sphi 0, %s34
      %s38 = sphi 0, %s37
      %s54 = sphi 0, %s38
      %s62 = sphi 0, %s64
      %s65 = sphi 0, %s62
      %s66 = sphi 0, %s65
      %s82 = sphi 0, %s66
    $region4: #{tpu_custom_call.1} parent=1 // loop_header_branch
      %13 = sbr.rel (%p11) target = $region8
    $region5: #{tpu_custom_call.1} parent=1 // loop_body
      %s15 = ssub.s32 %s10, 1
      %s16 = ssub.s32 %s10, 2
      %s23 = sadd.s32 1, %s18
      %p24 = scmp.ge.s32.totalorder %s23, 1
      %s25 = scalar_select %p24, 0, %s23
      %s26 = sadd.s32 1, %s17
      %s27 = scalar_select %p24, %s26, %s17
      %p28 = scmp.ge.s32.totalorder %s27, 2
      %s29 = scalar_select %p28, 0, %s27
      %s30 = ssub.s32 %s17, %s29
      %s31 = ssub.s32 %s18, %s25
      %s32 = sor.u32 %s30, %s31
      %p33 = scmp.eq.s32.totalorder %s32, 0
      %s35 = sadd.s32 %s34, 1
      %s36 = scalar_select %p33, %s34, %s35
      %p39 = pneg %p33
      %p40 = scmp.eq.s32.totalorder %s10, 1
      %p41 = por %p39, %p40
      %p42 = scmp.ne.s32.totalorder %s34, %s37
      %p43 = scmp.eq.s32.totalorder %s10, 0
      %p44 = por %p42, %p43
      %p45 = scmp.ne.s32.totalorder %s34, %s37
      %p46 = scmp.eq.s32.totalorder %s15, 1
      %p47 = por %p45, %p46
      %p48 = scmp.ne.s32.totalorder %s37, %s38
      %p49 = scmp.eq.s32.totalorder %s15, 0
      %p50 = por %p48, %p49
      %p51 = scmp.ne.s32.totalorder %s37, %s38
      %p52 = scmp.eq.s32.totalorder %s16, 1
      %p53 = por %p51, %p52
      %p55 = scmp.ne.s32.totalorder %s38, %s54
      %p56 = scmp.eq.s32.totalorder %s16, 0
      %p57 = por %p55, %p56
      %s58 = ssub.s32 %s17, %s29
      %s59 = ssub.s32 %s18, %s25
      %s60 = sor.u32 %s58, %s59
      %p61 = scmp.eq.s32.totalorder %s60, 0
      %s63 = sadd.s32 %s62, 1
      %s64 = scalar_select %p61, %s62, %s63
      %p67 = pneg %p61
      %p68 = scmp.eq.s32.totalorder %s10, 1
      %p69 = por %p67, %p68
      %p70 = scmp.ne.s32.totalorder %s62, %s65
      %p71 = scmp.eq.s32.totalorder %s10, 0
      %p72 = por %p70, %p71
      %p73 = scmp.ne.s32.totalorder %s62, %s65
      %p74 = scmp.eq.s32.totalorder %s15, 1
      %p75 = por %p73, %p74
      %p76 = scmp.ne.s32.totalorder %s65, %s66
      %p77 = scmp.eq.s32.totalorder %s15, 0
      %p78 = por %p76, %p77
      %p79 = scmp.ne.s32.totalorder %s65, %s66
      %p80 = scmp.eq.s32.totalorder %s16, 1
      %p81 = por %p79, %p80
      %p83 = scmp.ne.s32.totalorder %s66, %s82
      %p84 = scmp.eq.s32.totalorder %s16, 0
      %p85 = por %p83, %p84
      %p86 = scmp.le.s32.totalorder 1, %s10
      %p87 = scmp.lt.s32.totalorder %s10, 3
      %p88 = pnand %p86, %p87
      %p89 = pneg %p88
      // Predicated region
      $region9: #{tpu_custom_call.1} parent=5 // pred_check
        _
      $region10: #{tpu_custom_call.1} parent=5 // pred_check_branch
        %91 = sbr.rel (%p88) target = $region12
      $region11: #{tpu_custom_call.1} parent=5 // pred_region
        %s92 = ssub.s32 %s10, 1
      $region12: #{tpu_custom_call.1} parent=5 // pred_fallthru
        _
      %p93 = scmp.lt.s32.totalorder %s10, 2
      // Predicated region
      $region13: #{tpu_custom_call.1} parent=5 // pred_check
        %p94 = pneg %p93
      $region14: #{tpu_custom_call.1} parent=5 // pred_check_branch
        %96 = sbr.rel (%p94) target = $region16
      $region15: #{tpu_custom_call.1} parent=5 // pred_region
        // Predicated region
        $region17: #{tpu_custom_call.1} parent=15 // pred_check
          %p97 = pneg %p44
        $region18: #{tpu_custom_call.1} parent=15 // pred_check_branch
          %99 = sbr.rel (%p97) target = $region20
        $region19: #{tpu_custom_call.1} parent=15 // pred_region
          %s100 = sand.u32 %s34, 1
          %s101 = scalar_lea.sflag [#allocation3], %s100
          %s102 = sand.u32 %s34, 1
          %s103 = smul.addr %s102, 8
          %s104 = scalar_lea.vmem [#allocation2], %s103
          %s105 = smul.u32 2, %s18
          %107 = vsyncadd %s101, 0
          %s108 = smul.addr %s17, 2
          %s109 = sadd.s32 %s105, %s108
          %s110 = smul.addr %s109, 4
          %s111 = scalar_lea.hbm %s0, %s110
          %s113 = sshll.u32 %s111, 4
          %s114 = int_to_ptr.hbm [resolvable:$true] %s113
          %s115 = sshll.u32 %s104, 4
          %s116 = int_to_ptr.vmem [resolvable:$true] %s115
          %118 = dma.hbm_to_vmem [thread:$0]  %s114, 128, %s116, %s101
        $region20: #{tpu_custom_call.1} parent=15 // pred_fallthru
          _
      $region16: #{tpu_custom_call.1} parent=5 // pred_fallthru
        _
      %p119 = scmp.le.s32.totalorder 1, %s10
      %p120 = scmp.lt.s32.totalorder %s10, 3
      %p121 = pnand %p119, %p120
      %p122 = pneg %p121
      // Predicated region
      $region21: #{tpu_custom_call.1} parent=5 // pred_check
        _
      $region22: #{tpu_custom_call.1} parent=5 // pred_check_branch
        %124 = sbr.rel (%p121) target = $region24
      $region23: #{tpu_custom_call.1} parent=5 // pred_region
        %s125 = ssub.s32 %s10, 1
        %s126 = sand.u32 %s37, 1
        %s127 = scalar_lea.sflag [#allocation3], %s126
        %s128 = sand.u32 %s37, 1
        %s129 = smul.addr %s128, 8
        %s130 = scalar_lea.vmem [#allocation2], %s129
        // Predicated region
        $region25: #{tpu_custom_call.1} parent=23 // pred_check
          %p131 = pneg %p50
        $region26: #{tpu_custom_call.1} parent=23 // pred_check_branch
          %133 = sbr.rel (%p131) target = $region28
        $region27: #{tpu_custom_call.1} parent=23 // pred_region
          %135 = dma.done %s127, 128
        $region28: #{tpu_custom_call.1} parent=23 // pred_fallthru
          _
        %s136 = sand.u32 %s37, 1
        %s137 = scalar_lea.sflag [#allocation3], %s136
        %s138 = sand.u32 %s37, 1
        %s139 = smul.addr %s138, 8
        %s140 = scalar_lea.vmem [#allocation2], %s139
        %p141 = pneg %p50
        %p142 = pneg %p47
        %p143 = pneg %p78
        %p144 = pneg %p75
        %s145 = smul.u32 2, %s20
        %p146 = scmp.lt.s32.totalorder %s19, 1
        %s147 = scalar_select %p146, %s19, 1
        %p148 = scmp.lt.s32.totalorder %s145, 1
        %s149 = scalar_select %p148, %s145, 1
        %s150 = smul.addr %s147, 2
        %s151 = sadd.s32 %s149, %s150
        %s152 = smul.addr %s151, 8
        %s153 = scalar_lea.vmem %s1, %s152
        %s154 = smul.u32 2, %s20
        %s155 = smul.u32 2, %s20
        %p156 = scmp.lt.s32.totalorder %s19, 1
        %s157 = scalar_select %p156, %s19, 1
        %p158 = scmp.lt.s32.totalorder %s155, 1
        %s159 = scalar_select %p158, %s155, 1
        %s160 = smul.addr %s157, 2
        %s161 = sadd.s32 %s159, %s160
        %s162 = smul.addr %s161, 8
        %s163 = scalar_lea.vmem %s1, %s162
        %s164 = smul.u32 2, %s20
        %v165 = vld [vmem:[%s130] sm:$0xff]
        %167 = vst [vmem:[#allocation1] ss:$2 sm:$0xff] %v165
        %v168 = vld.sshfl [vmem:[#allocation1] sm:$0xff pattern:$0x75316420]
        %v169 = vld.sshfl [vmem:[#allocation1 + $0x8] sm:$0xff pattern:$0x75316420]
        %vm172 = vcmask 1043456
        %v173 = vsel %vm172, %v168, 0.0
        %v174 = vsel %vm172, %v169, 0.0
        %175 = vst [vmem:[%s163] sm:$0x7f] %v173
        %176 = vst [vmem:[%s163 + $0x8] sm:$0x7f] %v174
        %s177 = smul.u32 2, %s20
        %p178 = scmp.lt.s32.totalorder %s19, 1
        %s179 = scalar_select %p178, %s19, 1
        %p180 = scmp.lt.s32.totalorder %s177, 1
        %s181 = scalar_select %p180, %s177, 1
        %s182 = smul.addr %s179, 2
        %s183 = sadd.s32 %s181, %s182
        %s184 = smul.addr %s183, 8
        %s185 = scalar_lea.vmem %s1, %s184
        // Predicated region
        $region29: #{tpu_custom_call.1} parent=23 // pred_check
          %p186 = pneg %p75
        $region30: #{tpu_custom_call.1} parent=23 // pred_check_branch
          %188 = sbr.rel (%p186) target = $region32
        $region31: #{tpu_custom_call.1} parent=23 // pred_region
          %s189 = smul.u32 2, %s20
        $region32: #{tpu_custom_call.1} parent=23 // pred_fallthru
          _
      $region24: #{tpu_custom_call.1} parent=5 // pred_fallthru
        _
      %p190 = scmp.le.s32.totalorder 2, %s10
      // Predicated region
      $region33: #{tpu_custom_call.1} parent=5 // pred_check
        %p191 = pneg %p190
      $region34: #{tpu_custom_call.1} parent=5 // pred_check_branch
        %193 = sbr.rel (%p191) target = $region36
      $region35: #{tpu_custom_call.1} parent=5 // pred_region
        %s194 = ssub.s32 %s10, 2
        // Predicated region
        $region37: #{tpu_custom_call.1} parent=35 // pred_check
          %p195 = pneg %p81
        $region38: #{tpu_custom_call.1} parent=35 // pred_check_branch
          %197 = sbr.rel (%p195) target = $region40
        $region39: #{tpu_custom_call.1} parent=35 // pred_region
          %s198 = smul.u32 2, %s22
          %p199 = scmp.lt.s32.totalorder %s21, 1
          %s200 = scalar_select %p199, %s21, 1
          %p201 = scmp.lt.s32.totalorder %s198, 1
          %s202 = scalar_select %p201, %s198, 1
          %s203 = smul.addr %s200, 2
          %s204 = sadd.s32 %s202, %s203
          %s205 = smul.addr %s204, 8
          %s206 = scalar_lea.vmem %s1, %s205
        $region40: #{tpu_custom_call.1} parent=35 // pred_fallthru
          _
      $region36: #{tpu_custom_call.1} parent=5 // pred_fallthru
        _
    $region6: #{tpu_custom_call.1} parent=1 // loop_footer
      %s14 = sadd.s32 1, %s10
    $region7: #{tpu_custom_call.1} parent=1 // loop_footer_branch
      %9 = sbr.rel target = $region3
    $region8: #{tpu_custom_call.1} parent=1 // loop_exit
      _
    %207 = vsyncpa [#allocation3], 1
    %s208 = scalar_lea.sflag [#allocation3], 1
    %209 = vsyncpa %s208, 1

</llo_original>
